<compile_context>
chip_gen: v5e
topology: v5e:2x2
jax: 0.10.0
libtpu: 0.0.40
codegen_flags: <defaults>
</compile_context>

<pallas_src>
import functools

import jax
import jax.numpy as jnp
from jax import lax
from jax.experimental import pallas as pl
from jax.experimental.pallas import tpu as pltpu

_HID = 64  # hidden width of the fc MLP (fixed by the PyTorch module)


def _round_up(v, m):
    return ((v + m - 1) // m) * m


def _num_tensorcores():
    """Best-effort TensorCore count (megacore); defaults to 1 (v5e/v6e)."""
    try:
        dev = jax.devices()[0]
        for attr in ("num_cores", "core_count"):
            v = getattr(dev, attr, None)
            if isinstance(v, int) and 0 < v <= 8:
                return v
    except Exception:
        pass
    return 1


def _encoder_kernel(x_ref, y_ref, w1x_ref, w1y_ref, w_ref, b_ref, out_ref, *,
                    tile_b, n_pts, x_dim, y_dim, z_dim):
    rows = tile_b * n_pts

    # (tile_b, N, f) -> (tile_b*N, f): collapse leading dims, lane dim untouched.
    x = x_ref[...].reshape(rows, x_dim)            # bf16
    y = y_ref[...].reshape(rows, y_dim)            # bf16
    b = b_ref[...]                                 # (4, D) f32

    # fc: Linear -> ReLU -> Linear -> ReLU -> Linear, all in zero-padded
    # D-wide space (zero-padded weights/biases are closed under Linear+ReLU),
    # bf16 MXU matmuls with f32 accumulation.
    h1 = (jnp.dot(x, w1x_ref[...], preferred_element_type=jnp.float32)
          + jnp.dot(y, w1y_ref[...], preferred_element_type=jnp.float32)
          + b[0:1, :])
    h1 = jnp.maximum(h1, 0.0)
    h2 = jnp.dot(h1.astype(jnp.bfloat16), w_ref[0],
                 preferred_element_type=jnp.float32) + b[1:2, :]
    h2 = jnp.maximum(h2, 0.0)
    s = jnp.dot(h2.astype(jnp.bfloat16), w_ref[1],
                preferred_element_type=jnp.float32) + b[2:3, :]

    # Per-batch mean over num_points: reshape + sublane reduce; rows of
    # different batch elements never mix, so padded trailing blocks are safe.
    s_mean = jnp.mean(s.reshape(tile_b, n_pts, s.shape[-1]), axis=1)

    # Fused heads: one matmul yields [mu | pre_var | zero-pad] as (tile_b, D).
    head = jnp.dot(s_mean.astype(jnp.bfloat16), w_ref[2],
                   preferred_element_type=jnp.float32) + b[3:4, :]

    # Softplus (matches F.softplus, beta=1, threshold=20) applied only on the
    # var lanes via a lane mask; store stays one lane-dense block.
    sp = jnp.where(head > 20.0, head,
                   jnp.log1p(jnp.exp(jnp.minimum(head, 20.0))))
    is_var = lax.broadcasted_iota(jnp.int32, head.shape, 1) >= z_dim
    out_ref[...] = jnp.where(is_var, sp, head).astype(out_ref.dtype)


def stochastic_encoder_forward(x, y, params, *, tile_b=None):
    """Pallas implementation of StochasticEncoder.forward.

    Args:
      x: (B, N, x_dim) float32
      y: (B, N, y_dim) float32
      params: dict of weights/biases (see init_params).
      tile_b: optional batch tile size override.

    Returns:
      mu:  (B, z_dim) float32
      var: (B, z_dim) float32
    """
    B, N, x_dim = x.shape
    y_dim = y.shape[-1]
    in_dim = x_dim + y_dim
    s_dim = params["w3"].shape[1]
    z_dim = params["wmu"].shape[1]

    # Uniform padded width (lane-dense, multiple of 128) for the whole chain.
    D = _round_up(max(_HID, s_dim, 2 * z_dim), 128)

    # ---- batch tile: sized by VMEM bytes, aligned to 8 sublanes -------------
    if tile_b is None:
        # ~18 B per row per D lane of live f32 + bf16 intermediates; keep the
        # per-step footprint around <= ~18 MiB so it fits every generation
        # (incl. v7x's 64 MiB physical VMEM) with double-buffered inputs.
        row_budget = max(N, (18 << 20) // (18 * D))
        tile_b = max(1, min(B, row_budget // N))
        ntc = _num_tensorcores()
        if ntc > 1 and B >= 16:
            # Only multi-TC chips benefit from >= ntc grid steps.
            tile_b = min(tile_b, max(8, (pl.cdiv(B, ntc) // 8) * 8))
    if tile_b < B:
        # Output block second-to-last dim must be a multiple of 8 (or full B).
        tile_b = min(B, max(8, (tile_b // 8) * 8))
    num_tiles = pl.cdiv(B, tile_b)

    # ---- pack parameters (zero-padded to D lanes, bf16 matmul operands) -----
    f32, bf16 = jnp.float32, jnp.bfloat16

    def padw(w):  # (p, q) -> (D, D)
        w = w.astype(f32)
        return jnp.pad(w, ((0, D - w.shape[0]), (0, D - w.shape[1])))

    def padb(bvec):  # (1, q) -> (1, D)
        bvec = bvec.reshape(1, -1).astype(f32)
        return jnp.pad(bvec, ((0, 0), (0, D - bvec.shape[1])))

    w1 = params["w1"]                                           # (in_dim, 64)
    w1x = jnp.pad(w1[:x_dim].astype(f32),
                  ((0, 0), (0, D - _HID))).astype(bf16)         # (x_dim, D)
    w1y = jnp.pad(w1[x_dim:].astype(f32),
                  ((0, 0), (0, D - _HID))).astype(bf16)         # (y_dim, D)
    wh = jnp.concatenate([params["wmu"], params["wvar"]], axis=1)   # (s_dim, 2z)
    w_slab = jnp.stack([padw(params["w2"]), padw(params["w3"]), padw(wh)],
                       axis=0).astype(bf16)                     # (3, D, D)
    bh = jnp.concatenate([params["bmu"].reshape(1, -1),
                          params["bvar"].reshape(1, -1)], axis=1)
    b_slab = jnp.concatenate([padb(params["b1"]), padb(params["b2"]),
                              padb(params["b3"]), padb(bh)], axis=0)  # (4, D) f32

    xb = x.astype(bf16)
    yb = y.astype(bf16)

    # ---- VMEM / cost bookkeeping --------------------------------------------
    rows = tile_b * N
    vmem_est = (rows * D * 18                                   # f32+bf16 intermediates
                + 2 * 2 * rows * in_dim * 2                     # x/y blocks (double-buffered)
                + 2 * (in_dim + 3 * D) * D * 2                  # weight operands
                + 2 * 4 * D * 4                                 # bias slab
                + 2 * tile_b * D * 4)                           # out block
    vmem_limit = int(min(64 << 20, max(32 << 20, int(vmem_est * 1.5))))

    flops = (2 * B * N * (in_dim * _HID + _HID * _HID + _HID * s_dim)
             + B * N * s_dim                                    # mean adds
             + 2 * B * s_dim * 2 * z_dim)                       # fused heads
    bytes_accessed = (2 * (x.size + y.size)
                      + 2 * (w1x.size + w1y.size + w_slab.size)
                      + 4 * b_slab.size + 4 * B * D)

    kernel = functools.partial(_encoder_kernel, tile_b=tile_b, n_pts=N,
                               x_dim=x_dim, y_dim=y_dim, z_dim=z_dim)

    packed = pl.pallas_call(
        kernel,
        out_shape=jax.ShapeDtypeStruct((B, D), jnp.float32),
        grid_spec=pltpu.PrefetchScalarGridSpec(
            num_scalar_prefetch=0,
            grid=(num_tiles,),
            in_specs=[
                pl.BlockSpec((tile_b, N, x_dim), lambda b: (b, 0, 0)),   # x
                pl.BlockSpec((tile_b, N, y_dim), lambda b: (b, 0, 0)),   # y
                pl.BlockSpec((x_dim, D), lambda b: (0, 0)),              # w1[:x_dim]
                pl.BlockSpec((y_dim, D), lambda b: (0, 0)),              # w1[x_dim:]
                pl.BlockSpec((3, D, D), lambda b: (0, 0, 0)),            # [w2|w3|wh]
                pl.BlockSpec((4, D), lambda b: (0, 0)),                  # biases
            ],
            out_specs=pl.BlockSpec((tile_b, D), lambda b: (b, 0)),       # [mu|var|pad]
        ),
        compiler_params=pltpu.CompilerParams(
            dimension_semantics=("parallel",),
            vmem_limit_bytes=vmem_limit),
        cost_estimate=pl.CostEstimate(
            flops=int(flops),
            transcendentals=int(B * D),
            bytes_accessed=int(bytes_accessed)),
    )(xb, yb, w1x, w1y, w_slab, b_slab)

    return packed[:, :z_dim], packed[:, z_dim:2 * z_dim]


def init_params(key, x_dim, y_dim, s_dim, z_dim):
    """Deterministic synthetic parameters matching the PyTorch module's shapes.

    Weights stored transposed vs. torch (as (in, out)) so the kernel does h @ W.
    Biases stored as (1, out).
    """
    in_dim = x_dim + y_dim
    ks = jax.random.split(key, 10)
    scale = 0.1
    return {
        "w1":   scale * jax.random.normal(ks[0], (in_dim, _HID), jnp.float32),
        "b1":   scale * jax.random.normal(ks[1], (1, _HID), jnp.float32),
        "w2":   scale * jax.random.normal(ks[2], (_HID, _HID), jnp.float32),
        "b2":   scale * jax.random.normal(ks[3], (1, _HID), jnp.float32),
        "w3":   scale * jax.random.normal(ks[4], (_HID, s_dim), jnp.float32),
        "b3":   scale * jax.random.normal(ks[5], (1, s_dim), jnp.float32),
        "wmu":  scale * jax.random.normal(ks[6], (s_dim, z_dim), jnp.float32),
        "bmu":  scale * jax.random.normal(ks[7], (1, z_dim), jnp.float32),
        "wvar": scale * jax.random.normal(ks[8], (s_dim, z_dim), jnp.float32),
        "bvar": scale * jax.random.normal(ks[9], (1, z_dim), jnp.float32),
    }


def _reference_forward(x, y, p):
    """Pure-JAX f32 reference for correctness checking."""
    h = jnp.concatenate([x, y], axis=-1)
    h1 = jnp.maximum(h @ p["w1"] + p["b1"], 0.0)
    h2 = jnp.maximum(h1 @ p["w2"] + p["b2"], 0.0)
    s = h2 @ p["w3"] + p["b3"]
    s = s.mean(axis=1)
    mu = s @ p["wmu"] + p["bmu"]
    var = jax.nn.softplus(s @ p["wvar"] + p["bvar"])
    return mu, var


if __name__ == "__main__":
    B, N = 8, 8
    x_dim, y_dim, s_dim, z_dim = 4, 4, 32, 16

    key = jax.random.PRNGKey(0)
    kx, ky, kp = jax.random.split(key, 3)
    x = jax.random.normal(kx, (B, N, x_dim), jnp.float32)
    y = jax.random.normal(ky, (B, N, y_dim), jnp.float32)
    params = init_params(kp, x_dim, y_dim, s_dim, z_dim)

    mu, var = stochastic_encoder_forward(x, y, params)
    jax.block_until_ready((mu, var))

    mu_ref, var_ref = _reference_forward(x, y, params)
    assert mu.shape == (B, z_dim) and var.shape == (B, z_dim)
    # bf16 MXU matmuls (f32 accumulation): tolerance loosened accordingly.
    assert jnp.allclose(mu, mu_ref, atol=2e-2, rtol=2e-2)
    assert jnp.allclose(var, var_ref, atol=2e-2, rtol=2e-2)
    assert bool(jnp.all(jnp.isfinite(mu))) and bool(jnp.all(jnp.isfinite(var)))

    print("KERNEL_OK")
</pallas_src>

<mosaic_0001>
module attributes {stable_mosaic.version = 11 : i64} {
  func.func @_encoder_kernel(%arg0: i32, %arg1: memref<8x8x4xbf16, #tpu.memory_space<vmem>>, %arg2: memref<8x8x4xbf16, #tpu.memory_space<vmem>>, %arg3: memref<4x128xbf16, #tpu.memory_space<vmem>>, %arg4: memref<4x128xbf16, #tpu.memory_space<vmem>>, %arg5: memref<3x128x128xbf16, #tpu.memory_space<vmem>>, %arg6: memref<4x128xf32, #tpu.memory_space<vmem>>, %arg7: memref<8x128xf32, #tpu.memory_space<vmem>>) attributes {dimension_semantics = [#tpu.dimension_semantics<parallel>], iteration_bounds = array<i64: 1>, scalar_prefetch = 0 : i64, scratch_operands = 0 : i64, tpu.core_type = #tpu.core_type<tc>, window_params = [{transform_indices = @transform_0, window_bounds = array<i64: 8, 8, 4>}, {transform_indices = @transform_1, window_bounds = array<i64: 8, 8, 4>}, {pipeline_mode = #tpu.pipeline_mode<synchronous>, transform_indices = @transform_2, window_bounds = array<i64: 4, 128>}, {pipeline_mode = #tpu.pipeline_mode<synchronous>, transform_indices = @transform_3, window_bounds = array<i64: 4, 128>}, {pipeline_mode = #tpu.pipeline_mode<synchronous>, transform_indices = @transform_4, window_bounds = array<i64: 3, 128, 128>}, {pipeline_mode = #tpu.pipeline_mode<synchronous>, transform_indices = @transform_5, window_bounds = array<i64: 4, 128>}, {transform_indices = @transform_6, window_bounds = array<i64: 8, 128>}]} {
    %c0 = arith.constant 0 : index
    %c0_0 = arith.constant 0 : index
    %c0_1 = arith.constant 0 : index
    %0 = vector.load %arg1[%c0, %c0_0, %c0_1] : memref<8x8x4xbf16, #tpu.memory_space<vmem>>, vector<8x8x4xbf16>
    %1 = vector.shape_cast %0 : vector<8x8x4xbf16> to vector<64x4xbf16>
    %c0_2 = arith.constant 0 : index
    %c0_3 = arith.constant 0 : index
    %c0_4 = arith.constant 0 : index
    %2 = vector.load %arg2[%c0_2, %c0_3, %c0_4] : memref<8x8x4xbf16, #tpu.memory_space<vmem>>, vector<8x8x4xbf16>
    %3 = vector.shape_cast %2 : vector<8x8x4xbf16> to vector<64x4xbf16>
    %c0_5 = arith.constant 0 : index
    %c0_6 = arith.constant 0 : index
    %4 = vector.load %arg6[%c0_5, %c0_6] : memref<4x128xf32, #tpu.memory_space<vmem>>, vector<4x128xf32>
    %c0_7 = arith.constant 0 : index
    %c0_8 = arith.constant 0 : index
    %5 = vector.load %arg3[%c0_7, %c0_8] : memref<4x128xbf16, #tpu.memory_space<vmem>>, vector<4x128xbf16>
    %cst = arith.constant dense<0.000000e+00> : vector<64x128xf32>
    %6 = tpu.matmul %1, %5, %cst {dimension_numbers = #tpu.dot_dimension_numbers<[1], [0], [0], [1], [0, 0, 1, 1], [], []>} : vector<64x4xbf16>, vector<4x128xbf16>, vector<64x128xf32> -> vector<64x128xf32>
    %c0_9 = arith.constant 0 : index
    %c0_10 = arith.constant 0 : index
    %7 = vector.load %arg4[%c0_9, %c0_10] : memref<4x128xbf16, #tpu.memory_space<vmem>>, vector<4x128xbf16>
    %cst_11 = arith.constant dense<0.000000e+00> : vector<64x128xf32>
    %8 = tpu.matmul %3, %7, %cst_11 {dimension_numbers = #tpu.dot_dimension_numbers<[1], [0], [0], [1], [0, 0, 1, 1], [], []>} : vector<64x4xbf16>, vector<4x128xbf16>, vector<64x128xf32> -> vector<64x128xf32>
    %9 = arith.addf %6, %8 : vector<64x128xf32>
    %10 = vector.extract_strided_slice %4 {offsets = [0, 0], sizes = [1, 128], strides = [1, 1]} : vector<4x128xf32> to vector<1x128xf32>
    %11 = vector.broadcast %10 : vector<1x128xf32> to vector<64x128xf32>
    %12 = arith.addf %9, %11 : vector<64x128xf32>
    %cst_12 = arith.constant 0.000000e+00 : f32
    %13 = vector.broadcast %cst_12 : f32 to vector<64x128xf32>
    %14 = arith.maximumf %12, %13 : vector<64x128xf32>
    %15 = arith.truncf %14 : vector<64x128xf32> to vector<64x128xbf16>
    %c0_13 = arith.constant 0 : index
    %c0_14 = arith.constant 0 : index
    %c0_15 = arith.constant 0 : index
    %16 = vector.load %arg5[%c0_13, %c0_14, %c0_15] : memref<3x128x128xbf16, #tpu.memory_space<vmem>>, vector<1x128x128xbf16>
    %17 = vector.shape_cast %16 : vector<1x128x128xbf16> to vector<128x128xbf16>
    %cst_16 = arith.constant dense<0.000000e+00> : vector<64x128xf32>
    %18 = tpu.matmul %15, %17, %cst_16 {dimension_numbers = #tpu.dot_dimension_numbers<[1], [0], [0], [1], [0, 0, 1, 1], [], []>} : vector<64x128xbf16>, vector<128x128xbf16>, vector<64x128xf32> -> vector<64x128xf32>
    %19 = vector.extract_strided_slice %4 {offsets = [1, 0], sizes = [1, 128], strides = [1, 1]} : vector<4x128xf32> to vector<1x128xf32>
    %20 = vector.broadcast %19 : vector<1x128xf32> to vector<64x128xf32>
    %21 = arith.addf %18, %20 : vector<64x128xf32>
    %cst_17 = arith.constant 0.000000e+00 : f32
    %22 = vector.broadcast %cst_17 : f32 to vector<64x128xf32>
    %23 = arith.maximumf %21, %22 : vector<64x128xf32>
    %24 = arith.truncf %23 : vector<64x128xf32> to vector<64x128xbf16>
    %c1 = arith.constant 1 : index
    %c0_18 = arith.constant 0 : index
    %c0_19 = arith.constant 0 : index
    %25 = vector.load %arg5[%c1, %c0_18, %c0_19] : memref<3x128x128xbf16, #tpu.memory_space<vmem>>, vector<1x128x128xbf16>
    %26 = vector.shape_cast %25 : vector<1x128x128xbf16> to vector<128x128xbf16>
    %cst_20 = arith.constant dense<0.000000e+00> : vector<64x128xf32>
    %27 = tpu.matmul %24, %26, %cst_20 {dimension_numbers = #tpu.dot_dimension_numbers<[1], [0], [0], [1], [0, 0, 1, 1], [], []>} : vector<64x128xbf16>, vector<128x128xbf16>, vector<64x128xf32> -> vector<64x128xf32>
    %28 = vector.extract_strided_slice %4 {offsets = [2, 0], sizes = [1, 128], strides = [1, 1]} : vector<4x128xf32> to vector<1x128xf32>
    %29 = vector.broadcast %28 : vector<1x128xf32> to vector<64x128xf32>
    %30 = arith.addf %27, %29 : vector<64x128xf32>
    %31 = vector.shape_cast %30 : vector<64x128xf32> to vector<8x8x128xf32>
    %cst_21 = arith.constant dense<0.000000e+00> : vector<8x128xf32>
    %32 = vector.multi_reduction <add>, %31, %cst_21 [1] : vector<8x8x128xf32> to vector<8x128xf32>
    %cst_22 = arith.constant 8.000000e+00 : f32
    %33 = vector.broadcast %cst_22 : f32 to vector<8x128xf32>
    %34 = arith.divf %32, %33 : vector<8x128xf32>
    %35 = arith.truncf %34 : vector<8x128xf32> to vector<8x128xbf16>
    %c2 = arith.constant 2 : index
    %c0_23 = arith.constant 0 : index
    %c0_24 = arith.constant 0 : index
    %36 = vector.load %arg5[%c2, %c0_23, %c0_24] : memref<3x128x128xbf16, #tpu.memory_space<vmem>>, vector<1x128x128xbf16>
    %37 = vector.shape_cast %36 : vector<1x128x128xbf16> to vector<128x128xbf16>
    %cst_25 = arith.constant dense<0.000000e+00> : vector<8x128xf32>
    %38 = tpu.matmul %35, %37, %cst_25 {dimension_numbers = #tpu.dot_dimension_numbers<[1], [0], [0], [1], [0, 0, 1, 1], [], []>} : vector<8x128xbf16>, vector<128x128xbf16>, vector<8x128xf32> -> vector<8x128xf32>
    %39 = vector.extract_strided_slice %4 {offsets = [3, 0], sizes = [1, 128], strides = [1, 1]} : vector<4x128xf32> to vector<1x128xf32>
    %40 = vector.broadcast %39 : vector<1x128xf32> to vector<8x128xf32>
    %41 = arith.addf %38, %40 : vector<8x128xf32>
    %cst_26 = arith.constant 2.000000e+01 : f32
    %42 = vector.broadcast %cst_26 : f32 to vector<8x128xf32>
    %43 = arith.cmpf ogt, %41, %42 : vector<8x128xf32>
    %cst_27 = arith.constant 2.000000e+01 : f32
    %44 = vector.broadcast %cst_27 : f32 to vector<8x128xf32>
    %45 = arith.minimumf %41, %44 : vector<8x128xf32>
    %46 = math.exp %45 : vector<8x128xf32>
    %47 = math.log1p %46 : vector<8x128xf32>
    %48 = arith.select %43, %41, %47 : vector<8x128xi1>, vector<8x128xf32>
    %49 = tpu.iota {dimensions = array<i32: 1>} : vector<8x128xi32>
    %c16_i32 = arith.constant 16 : i32
    %50 = vector.broadcast %c16_i32 : i32 to vector<8x128xi32>
    %51 = arith.cmpi sge, %49, %50 : vector<8x128xi32>
    %52 = arith.select %51, %48, %41 : vector<8x128xi1>, vector<8x128xf32>
    %c0_28 = arith.constant 0 : index
    %c0_29 = arith.constant 0 : index
    %53 = vector.load %arg7[%c0_28, %c0_29] : memref<8x128xf32, #tpu.memory_space<vmem>>, vector<8x128xf32>
    tpu.vector_store %arg7[%c0_28, %c0_29], %52 {strides = array<i32>} : memref<8x128xf32, #tpu.memory_space<vmem>>, vector<8x128xf32>,
    return
  }
  func.func @transform_0(%arg0: i32) -> (i32, i32, i32) {
    %c0_i32 = arith.constant 0 : i32
    %c0_i32_0 = arith.constant 0 : i32
    %c0_i32_1 = arith.constant 0 : i32
    return %arg0, %c0_i32, %c0_i32_0 : i32, i32, i32
  }
  func.func @transform_1(%arg0: i32) -> (i32, i32, i32) {
    %c0_i32 = arith.constant 0 : i32
    %c0_i32_0 = arith.constant 0 : i32
    %c0_i32_1 = arith.constant 0 : i32
    return %arg0, %c0_i32, %c0_i32_0 : i32, i32, i32
  }
  func.func @transform_2(%arg0: i32) -> (i32, i32) {
    %c0_i32 = arith.constant 0 : i32
    %c0_i32_0 = arith.constant 0 : i32
    %c0_i32_1 = arith.constant 0 : i32
    return %c0_i32, %c0_i32_0 : i32, i32
  }
  func.func @transform_3(%arg0: i32) -> (i32, i32) {
    %c0_i32 = arith.constant 0 : i32
    %c0_i32_0 = arith.constant 0 : i32
    %c0_i32_1 = arith.constant 0 : i32
    return %c0_i32, %c0_i32_0 : i32, i32
  }
  func.func @transform_4(%arg0: i32) -> (i32, i32, i32) {
    %c0_i32 = arith.constant 0 : i32
    %c0_i32_0 = arith.constant 0 : i32
    %c0_i32_1 = arith.constant 0 : i32
    %c0_i32_2 = arith.constant 0 : i32
    return %c0_i32, %c0_i32_0, %c0_i32_1 : i32, i32, i32
  }
  func.func @transform_5(%arg0: i32) -> (i32, i32) {
    %c0_i32 = arith.constant 0 : i32
    %c0_i32_0 = arith.constant 0 : i32
    %c0_i32_1 = arith.constant 0 : i32
    return %c0_i32, %c0_i32_0 : i32, i32
  }
  func.func @transform_6(%arg0: i32) -> (i32, i32) {
    %c0_i32 = arith.constant 0 : i32
    %c0_i32_0 = arith.constant 0 : i32
    return %arg0, %c0_i32 : i32, i32
  }
}

</mosaic_0001>

<llo_original>
// kernel: tpu_custom_call.1
$region0: #{tpu_custom_call.1}
  #allocation0 [shape = 'u32[]', space=smem, size = 0x4, offset = 0x4, fixed_abs, tag = 'smem constant byte address 0x4 - core index']
  #allocation1 [shape = 'u32[72,128]{1,0:T(1,128)}', space=vmem, size = 0x9000, scoped, tag = 'internal scratch']
  %s0 = inlined_call_operand.vmem [shape: bf16[8,8,4], index: 0, kind: input, shape index: {}]
  %s1 = inlined_call_operand.vmem [shape: bf16[8,8,4], index: 1, kind: input, shape index: {}]
  %s2 = inlined_call_operand.vmem [shape: bf16[4,128], index: 2, kind: input, shape index: {}]
  %s3 = inlined_call_operand.vmem [shape: bf16[4,128], index: 3, kind: input, shape index: {}]
  %s4 = inlined_call_operand.hbm [shape: bf16[3,128,128], index: 4, kind: input, shape index: {}]
  %s5 = inlined_call_operand.vmem [shape: f32[4,128], index: 5, kind: input, shape index: {}]
  %s6 = inlined_call_operand.hbm [shape: f32[8,128], index: 6, kind: output, shape index: {}]
  %s7 = sld [smem:[#allocation0]]
  $region38: #{tpu_custom_call.1} parent=0
    _
  %s9 = ssub.s32 1, %s7
  %s10 = scalar_select 0, %s9, %s7
  $region1: #{tpu_custom_call.1} parent=0
    #allocation2 [shape = 'u8[98304]{0}', space=vmem, size = 0x18000, scoped, tag = 'input window, operand 4, single buffered']
    #allocation3 [shape = 's32[1]{0}', space=sflag, size = 0x4, scoped, tag = 'scoped memory for tpu_custom_call.1']
    #allocation4 [shape = 's32[1]{0}', space=sflag, size = 0x4, scoped, tag = 'scoped memory for tpu_custom_call.1']
    #allocation5 [shape = 'u8[4096]{0}', space=vmem, size = 0x1000, scoped, tag = 'output window, operand 0, single buffered']
    %11 = vsyncpa [#allocation3], 0
    %12 = vsyncpa [#allocation4], 0
    // Predicated region
    $region2: #{tpu_custom_call.1} parent=1 // pred_check
      _
    $region3: #{tpu_custom_call.1} parent=1 // pred_check_branch
      %14 = sbr.rel (0) target = $region5
    $region4: #{tpu_custom_call.1} parent=1 // pred_region
      _
    $region5: #{tpu_custom_call.1} parent=1 // pred_fallthru
      _
    // Predicated region
    $region6: #{tpu_custom_call.1} parent=1 // pred_check
      _
    $region7: #{tpu_custom_call.1} parent=1 // pred_check_branch
      %16 = sbr.rel (0) target = $region9
    $region8: #{tpu_custom_call.1} parent=1 // pred_region
      _
    $region9: #{tpu_custom_call.1} parent=1 // pred_fallthru
      _
    // Predicated region
    $region10: #{tpu_custom_call.1} parent=1 // pred_check
      _
    $region11: #{tpu_custom_call.1} parent=1 // pred_check_branch
      %18 = sbr.rel (0) target = $region13
    $region12: #{tpu_custom_call.1} parent=1 // pred_region
      _
    $region13: #{tpu_custom_call.1} parent=1 // pred_fallthru
      _
    // Predicated region
    $region14: #{tpu_custom_call.1} parent=1 // pred_check
      _
    $region15: #{tpu_custom_call.1} parent=1 // pred_check_branch
      %20 = sbr.rel (0) target = $region17
    $region16: #{tpu_custom_call.1} parent=1 // pred_region
      _
    $region17: #{tpu_custom_call.1} parent=1 // pred_fallthru
      _
    // Predicated region
    $region18: #{tpu_custom_call.1} parent=1 // pred_check
      _
    $region19: #{tpu_custom_call.1} parent=1 // pred_check_branch
      %22 = sbr.rel (0) target = $region21
    $region20: #{tpu_custom_call.1} parent=1 // pred_region
      %24 = vsyncadd [#allocation3], 0
      %s25 = sshll.u32 %s4, 4
      %s26 = int_to_ptr.hbm [resolvable:$true] %s25
      %s27 = sshll.u32 [#allocation2], 4
      %s28 = int_to_ptr.vmem [resolvable:$true] %s27
      %33 = dma.hbm_to_vmem [thread:$0]  %s26, 3072, %s28, [#allocation3], 64, 64, 4
    $region21: #{tpu_custom_call.1} parent=1 // pred_fallthru
      _
    // Predicated region
    $region22: #{tpu_custom_call.1} parent=1 // pred_check
      _
    $region23: #{tpu_custom_call.1} parent=1 // pred_check_branch
      %35 = sbr.rel (0) target = $region25
    $region24: #{tpu_custom_call.1} parent=1 // pred_region
      _
    $region25: #{tpu_custom_call.1} parent=1 // pred_fallthru
      _
    // Predicated region
    $region26: #{tpu_custom_call.1} parent=1 // pred_check
      _
    $region27: #{tpu_custom_call.1} parent=1 // pred_check_branch
      %37 = sbr.rel (0) target = $region29
    $region28: #{tpu_custom_call.1} parent=1 // pred_region
      %39 = dma.done [#allocation3], 3072
    $region29: #{tpu_custom_call.1} parent=1 // pred_fallthru
      _
    %v41 = vld [vmem:[%s0] sm:$0xf]
    %v42 = vld [vmem:[%s0 + $0x4] sm:$0xf]
    %v43 = vld [vmem:[%s0 + $0x8] sm:$0xf]
    %v44 = vld [vmem:[%s0 + $0xc] sm:$0xf]
    %v45 = vld [vmem:[%s0 + $0x10] sm:$0xf]
    %v46 = vld [vmem:[%s0 + $0x14] sm:$0xf]
    %v47 = vld [vmem:[%s0 + $0x18] sm:$0xf]
    %v48 = vld [vmem:[%s0 + $0x1c] sm:$0xf]
    %v49 = vld [vmem:[%s1] sm:$0xf]
    %v50 = vld [vmem:[%s1 + $0x4] sm:$0xf]
    %v51 = vld [vmem:[%s1 + $0x8] sm:$0xf]
    %v52 = vld [vmem:[%s1 + $0xc] sm:$0xf]
    %v53 = vld [vmem:[%s1 + $0x10] sm:$0xf]
    %v54 = vld [vmem:[%s1 + $0x14] sm:$0xf]
    %v55 = vld [vmem:[%s1 + $0x18] sm:$0xf]
    %v56 = vld [vmem:[%s1 + $0x1c] sm:$0xf]
    %v57 = vld [vmem:[%s5] sm:$0xf]
    %v58 = vld [vmem:[%s2] sm:$0x3]
    %v59 = vld [vmem:[%s3] sm:$0x3]
    %v68 = vunpack.c.l.b16 %v49
    %v69 = vunpack.c.l.b16 %v50
    %v70 = vunpack.c.l.b16 %v51
    %v71 = vunpack.c.l.b16 %v52
    %v72 = vunpack.c.l.b16 %v53
    %v73 = vunpack.c.l.b16 %v54
    %v74 = vunpack.c.l.b16 %v55
    %v75 = vunpack.c.l.b16 %v56
    %v76 = vpack.c.b16 %v69, %v68
    %v77 = vpack.c.b16 %v71, %v70
    %v78 = vpack.c.b16 %v73, %v72
    %v79 = vpack.c.b16 %v75, %v74
    %vm80 = vcmask 31744
    %v82 = vsel %vm80, %v76, 0
    %v85 = vsel %vm80, %v77, 0
    %v88 = vsel %vm80, %v78, 0
    %v91 = vsel %vm80, %v79, 0
    %vm93 = vcmask 1041408
    %v95 = vsel %vm93, %v59, 0
    %97 = vmatpush.bf16.msra.mxu0 0
    %98 = vmatpush.bf16.msra.mxu0 0
    %99 = vmatpush.bf16.msra.mxu0 0
    %100 = vmatpush.bf16.msra.mxu0 0
    %101 = vmatpush.bf16.msra.mxu0 0
    %102 = vmatpush.bf16.msra.mxu0 0
    %103 = vmatpush.bf16.msra.mxu0 0
    %104 = vmatpush.bf16.msra.mxu0 %v95
    %105 = vmatmul.bf16.gmra.mxu0 %v82
    %v106 = vpop.f32.mrf.mxu0
    %v107 = vadd.f32 0.0, %v106
    %v108 = vpop.f32.mrf.mxu0
    %v109 = vadd.f32 0.0, %v108
    %110 = vmatmul.bf16.gmra.mxu0 %v85
    %v111 = vpop.f32.mrf.mxu0
    %v112 = vadd.f32 0.0, %v111
    %v113 = vpop.f32.mrf.mxu0
    %v114 = vadd.f32 0.0, %v113
    %115 = vmatmul.bf16.gmra.mxu0 %v88
    %v116 = vpop.f32.mrf.mxu0
    %v117 = vadd.f32 0.0, %v116
    %v118 = vpop.f32.mrf.mxu0
    %v119 = vadd.f32 0.0, %v118
    %120 = vmatmul.bf16.gmra.mxu0 %v91
    %v121 = vpop.f32.mrf.mxu0
    %v122 = vadd.f32 0.0, %v121
    %v123 = vpop.f32.mrf.mxu0
    %v124 = vadd.f32 0.0, %v123
    %125 = vdwg.mxu0
    %v134 = vunpack.c.l.b16 %v41
    %v135 = vunpack.c.l.b16 %v42
    %v136 = vunpack.c.l.b16 %v43
    %v137 = vunpack.c.l.b16 %v44
    %v138 = vunpack.c.l.b16 %v45
    %v139 = vunpack.c.l.b16 %v46
    %v140 = vunpack.c.l.b16 %v47
    %v141 = vunpack.c.l.b16 %v48
    %v142 = vpack.c.b16 %v135, %v134
    %v143 = vpack.c.b16 %v137, %v136
    %v144 = vpack.c.b16 %v139, %v138
    %v145 = vpack.c.b16 %v141, %v140
    %v147 = vsel %vm80, %v142, 0
    %v150 = vsel %vm80, %v143, 0
    %v153 = vsel %vm80, %v144, 0
    %v156 = vsel %vm80, %v145, 0
    %v159 = vsel %vm93, %v58, 0
    %161 = vmatpush.bf16.msra.mxu0 0
    %162 = vmatpush.bf16.msra.mxu0 0
    %163 = vmatpush.bf16.msra.mxu0 0
    %164 = vmatpush.bf16.msra.mxu0 0
    %165 = vmatpush.bf16.msra.mxu0 0
    %166 = vmatpush.bf16.msra.mxu0 0
    %167 = vmatpush.bf16.msra.mxu0 0
    %168 = vmatpush.bf16.msra.mxu0 %v159
    %169 = vmatmul.bf16.gmra.mxu0 %v147
    %v170 = vpop.f32.mrf.mxu0
    %v171 = vadd.f32 %v107, %v170
    %v172 = vpop.f32.mrf.mxu0
    %v173 = vadd.f32 %v109, %v172
    %174 = vmatmul.bf16.gmra.mxu0 %v150
    %v175 = vpop.f32.mrf.mxu0
    %v176 = vadd.f32 %v112, %v175
    %v177 = vpop.f32.mrf.mxu0
    %v178 = vadd.f32 %v114, %v177
    %179 = vmatmul.bf16.gmra.mxu0 %v153
    %v180 = vpop.f32.mrf.mxu0
    %v181 = vadd.f32 %v117, %v180
    %v182 = vpop.f32.mrf.mxu0
    %v183 = vadd.f32 %v119, %v182
    %184 = vmatmul.bf16.gmra.mxu0 %v156
    %v185 = vpop.f32.mrf.mxu0
    %v186 = vadd.f32 %v122, %v185
    %v187 = vpop.f32.mrf.mxu0
    %v188 = vadd.f32 %v124, %v187
    %189 = vdwg.mxu0
    %v190 = vperm.slane %v57, 0
    %v191 = vadd.f32 %v171, %v190
    %v192 = vadd.f32 %v173, %v190
    %v193 = vadd.f32 %v176, %v190
    %v194 = vadd.f32 %v178, %v190
    %v195 = vadd.f32 %v181, %v190
    %v196 = vadd.f32 %v183, %v190
    %v197 = vadd.f32 %v186, %v190
    %v198 = vadd.f32 %v188, %v190
    %v199 = vmax.f32 %v191, 0.0
    %v200 = vmax.f32 %v192, 0.0
    %v201 = vmax.f32 %v193, 0.0
    %v202 = vmax.f32 %v194, 0.0
    %v203 = vmax.f32 %v195, 0.0
    %v204 = vmax.f32 %v196, 0.0
    %v205 = vmax.f32 %v197, 0.0
    %v206 = vmax.f32 %v198, 0.0
    %v207 = vpack.c.bf16 %v200, %v199
    %v208 = vpack.c.bf16 %v202, %v201
    %v209 = vpack.c.bf16 %v204, %v203
    %v210 = vpack.c.bf16 %v206, %v205
    %v211 = vld [vmem:[#allocation2] sm:$0xf]
    %v212 = vld [vmem:[#allocation2 + $0x4] sm:$0xf]
    %v213 = vld [vmem:[#allocation2 + $0x8] sm:$0xf]
    %v214 = vld [vmem:[#allocation2 + $0xc] sm:$0xf]
    %v215 = vld [vmem:[#allocation2 + $0x10] sm:$0xf]
    %v216 = vld [vmem:[#allocation2 + $0x14] sm:$0xf]
    %v217 = vld [vmem:[#allocation2 + $0x18] sm:$0xf]
    %v218 = vld [vmem:[#allocation2 + $0x1c] sm:$0xf]
    %v219 = vld [vmem:[#allocation2 + $0x20] sm:$0xf]
    %v220 = vld [vmem:[#allocation2 + $0x24] sm:$0xf]
    %v221 = vld [vmem:[#allocation2 + $0x28] sm:$0xf]
    %v222 = vld [vmem:[#allocation2 + $0x2c] sm:$0xf]
    %v223 = vld [vmem:[#allocation2 + $0x30] sm:$0xf]
    %v224 = vld [vmem:[#allocation2 + $0x34] sm:$0xf]
    %v225 = vld [vmem:[#allocation2 + $0x38] sm:$0xf]
    %v226 = vld [vmem:[#allocation2 + $0x3c] sm:$0xf]
    %v227 = vperm.slane %v57, 1
    %v244 = vunpack.c.l.b16 %v211
    %v245 = vunpack.c.l.b16 %v212
    %v246 = vunpack.c.l.b16 %v213
    %v247 = vunpack.c.l.b16 %v214
    %v248 = vunpack.c.l.b16 %v215
    %v249 = vunpack.c.l.b16 %v216
    %v250 = vunpack.c.l.b16 %v217
    %v251 = vunpack.c.l.b16 %v218
    %v252 = vunpack.c.l.b16 %v219
    %v253 = vunpack.c.l.b16 %v220
    %v254 = vunpack.c.l.b16 %v221
    %v255 = vunpack.c.l.b16 %v222
    %v256 = vunpack.c.l.b16 %v223
    %v257 = vunpack.c.l.b16 %v224
    %v258 = vunpack.c.l.b16 %v225
    %v259 = vunpack.c.l.b16 %v226
    %v260 = vpack.c.b16 %v245, %v244
    %v261 = vpack.c.b16 %v247, %v246
    %v262 = vpack.c.b16 %v249, %v248
    %v263 = vpack.c.b16 %v251, %v250
    %v264 = vpack.c.b16 %v253, %v252
    %v265 = vpack.c.b16 %v255, %v254
    %v266 = vpack.c.b16 %v257, %v256
    %v267 = vpack.c.b16 %v259, %v258
    %276 = vmatpush.bf16.msra.mxu0 %v267
    %277 = vmatpush.bf16.msra.mxu0 %v266
    %278 = vmatpush.bf16.msra.mxu0 %v265
    %279 = vmatpush.bf16.msra.mxu0 %v264
    %280 = vmatpush.bf16.msra.mxu0 %v263
    %281 = vmatpush.bf16.msra.mxu0 %v262
    %282 = vmatpush.bf16.msra.mxu0 %v261
    %283 = vmatpush.bf16.msra.mxu0 %v260
    %284 = vmatmul.bf16.gmra.mxu0 %v207
    %v285 = vpop.f32.mrf.mxu0
    %v286 = vadd.f32 %v227, %v285
    %v287 = vpop.f32.mrf.mxu0
    %v288 = vadd.f32 %v227, %v287
    %289 = vmatmul.bf16.gmra.mxu0 %v208
    %v290 = vpop.f32.mrf.mxu0
    %v291 = vadd.f32 %v227, %v290
    %v292 = vpop.f32.mrf.mxu0
    %v293 = vadd.f32 %v227, %v292
    %294 = vmatmul.bf16.gmra.mxu0 %v209
    %v295 = vpop.f32.mrf.mxu0
    %v296 = vadd.f32 %v227, %v295
    %v297 = vpop.f32.mrf.mxu0
    %v298 = vadd.f32 %v227, %v297
    %299 = vmatmul.bf16.gmra.mxu0 %v210
    %v300 = vpop.f32.mrf.mxu0
    %v301 = vadd.f32 %v227, %v300
    %v302 = vpop.f32.mrf.mxu0
    %v303 = vadd.f32 %v227, %v302
    %304 = vdwg.mxu0
    %v305 = vmax.f32 %v286, 0.0
    %v306 = vmax.f32 %v288, 0.0
    %v307 = vmax.f32 %v291, 0.0
    %v308 = vmax.f32 %v293, 0.0
    %v309 = vmax.f32 %v296, 0.0
    %v310 = vmax.f32 %v298, 0.0
    %v311 = vmax.f32 %v301, 0.0
    %v312 = vmax.f32 %v303, 0.0
    %v313 = vpack.c.bf16 %v306, %v305
    %v314 = vpack.c.bf16 %v308, %v307
    %v315 = vpack.c.bf16 %v310, %v309
    %v316 = vpack.c.bf16 %v312, %v311
    %s317 = scalar_lea.vmem [#allocation2], 64
    %v318 = vld [vmem:[%s317] sm:$0xf]
    %v319 = vld [vmem:[%s317 + $0x4] sm:$0xf]
    %v320 = vld [vmem:[%s317 + $0x8] sm:$0xf]
    %v321 = vld [vmem:[%s317 + $0xc] sm:$0xf]
    %v322 = vld [vmem:[%s317 + $0x10] sm:$0xf]
    %v323 = vld [vmem:[%s317 + $0x14] sm:$0xf]
    %v324 = vld [vmem:[%s317 + $0x18] sm:$0xf]
    %v325 = vld [vmem:[%s317 + $0x1c] sm:$0xf]
    %v326 = vld [vmem:[%s317 + $0x20] sm:$0xf]
    %v327 = vld [vmem:[%s317 + $0x24] sm:$0xf]
    %v328 = vld [vmem:[%s317 + $0x28] sm:$0xf]
    %v329 = vld [vmem:[%s317 + $0x2c] sm:$0xf]
    %v330 = vld [vmem:[%s317 + $0x30] sm:$0xf]
    %v331 = vld [vmem:[%s317 + $0x34] sm:$0xf]
    %v332 = vld [vmem:[%s317 + $0x38] sm:$0xf]
    %v333 = vld [vmem:[%s317 + $0x3c] sm:$0xf]
    %v334 = vperm.slane %v57, 2
    %v351 = vunpack.c.l.b16 %v318
    %v352 = vunpack.c.l.b16 %v319
    %v353 = vunpack.c.l.b16 %v320
    %v354 = vunpack.c.l.b16 %v321
    %v355 = vunpack.c.l.b16 %v322
    %v356 = vunpack.c.l.b16 %v323
    %v357 = vunpack.c.l.b16 %v324
    %v358 = vunpack.c.l.b16 %v325
    %v359 = vunpack.c.l.b16 %v326
    %v360 = vunpack.c.l.b16 %v327
    %v361 = vunpack.c.l.b16 %v328
    %v362 = vunpack.c.l.b16 %v329
    %v363 = vunpack.c.l.b16 %v330
    %v364 = vunpack.c.l.b16 %v331
    %v365 = vunpack.c.l.b16 %v332
    %v366 = vunpack.c.l.b16 %v333
    %v367 = vpack.c.b16 %v352, %v351
    %v368 = vpack.c.b16 %v354, %v353
    %v369 = vpack.c.b16 %v356, %v355
    %v370 = vpack.c.b16 %v358, %v357
    %v371 = vpack.c.b16 %v360, %v359
    %v372 = vpack.c.b16 %v362, %v361
    %v373 = vpack.c.b16 %v364, %v363
    %v374 = vpack.c.b16 %v366, %v365
    %383 = vmatpush.bf16.msra.mxu0 %v374
    %384 = vmatpush.bf16.msra.mxu0 %v373
    %385 = vmatpush.bf16.msra.mxu0 %v372
    %386 = vmatpush.bf16.msra.mxu0 %v371
    %387 = vmatpush.bf16.msra.mxu0 %v370
    %388 = vmatpush.bf16.msra.mxu0 %v369
    %389 = vmatpush.bf16.msra.mxu0 %v368
    %390 = vmatpush.bf16.msra.mxu0 %v367
    %391 = vmatmul.bf16.gmra.mxu0 %v313
    %v392 = vpop.f32.mrf.mxu0
    %v393 = vadd.f32 %v334, %v392
    %v394 = vpop.f32.mrf.mxu0
    %v395 = vadd.f32 %v334, %v394
    %396 = vmatmul.bf16.gmra.mxu0 %v314
    %v397 = vpop.f32.mrf.mxu0
    %v398 = vadd.f32 %v334, %v397
    %v399 = vpop.f32.mrf.mxu0
    %v400 = vadd.f32 %v334, %v399
    %401 = vmatmul.bf16.gmra.mxu0 %v315
    %v402 = vpop.f32.mrf.mxu0
    %v403 = vadd.f32 %v334, %v402
    %v404 = vpop.f32.mrf.mxu0
    %v405 = vadd.f32 %v334, %v404
    %406 = vmatmul.bf16.gmra.mxu0 %v316
    %v407 = vpop.f32.mrf.mxu0
    %v408 = vadd.f32 %v334, %v407
    %v409 = vpop.f32.mrf.mxu0
    %v410 = vadd.f32 %v334, %v409
    %411 = vdwg.mxu0
    %v412 = vrot.slane %v393, 4
    %v413 = vadd.f32 %v393, %v412
    %v414 = vrot.slane %v413, 2
    %v415 = vadd.f32 %v413, %v414
    %v416 = vrot.slane %v415, 1
    %v417 = vadd.f32 %v415, %v416
    %v418 = vrot.slane %v395, 4
    %v419 = vadd.f32 %v395, %v418
    %v420 = vrot.slane %v419, 2
    %v421 = vadd.f32 %v419, %v420
    %v422 = vrot.slane %v421, 1
    %v423 = vadd.f32 %v421, %v422
    %v424 = vrot.slane %v398, 4
    %v425 = vadd.f32 %v398, %v424
    %v426 = vrot.slane %v425, 2
    %v427 = vadd.f32 %v425, %v426
    %v428 = vrot.slane %v427, 1
    %v429 = vadd.f32 %v427, %v428
    %v430 = vrot.slane %v400, 4
    %v431 = vadd.f32 %v400, %v430
    %v432 = vrot.slane %v431, 2
    %v433 = vadd.f32 %v431, %v432
    %v434 = vrot.slane %v433, 1
    %v435 = vadd.f32 %v433, %v434
    %v436 = vrot.slane %v403, 4
    %v437 = vadd.f32 %v403, %v436
    %v438 = vrot.slane %v437, 2
    %v439 = vadd.f32 %v437, %v438
    %v440 = vrot.slane %v439, 1
    %v441 = vadd.f32 %v439, %v440
    %v442 = vrot.slane %v405, 4
    %v443 = vadd.f32 %v405, %v442
    %v444 = vrot.slane %v443, 2
    %v445 = vadd.f32 %v443, %v444
    %v446 = vrot.slane %v445, 1
    %v447 = vadd.f32 %v445, %v446
    %v448 = vrot.slane %v408, 4
    %v449 = vadd.f32 %v408, %v448
    %v450 = vrot.slane %v449, 2
    %v451 = vadd.f32 %v449, %v450
    %v452 = vrot.slane %v451, 1
    %v453 = vadd.f32 %v451, %v452
    %v454 = vrot.slane %v410, 4
    %v455 = vadd.f32 %v410, %v454
    %v456 = vrot.slane %v455, 2
    %v457 = vadd.f32 %v455, %v456
    %v458 = vrot.slane %v457, 1
    %v459 = vadd.f32 %v457, %v458
    %v460 = vrcp.pop 8.0
    %v461 = vmul.f32 8.0, %v460
    %v462 = vsub.f32 1.0, %v461
    %v463 = vmul.f32 %v460, %v462
    %v464 = vadd.f32 %v460, %v463
    %vm465 = vweird.f32 %v460
    %v466 = vsel %vm465, %v460, %v464
    %v467 = vmul.f32 %v417, %v466
    %v468 = vmul.f32 %v423, %v466
    %v469 = vmul.f32 %v429, %v466
    %v470 = vmul.f32 %v435, %v466
    %v471 = vmul.f32 %v441, %v466
    %v472 = vmul.f32 %v447, %v466
    %v473 = vmul.f32 %v453, %v466
    %v474 = vmul.f32 %v459, %v466
    %v475 = vpack.c.bf16 %v467, %v467
    %v476 = vpack.c.bf16 %v468, %v468
    %v477 = vpack.c.bf16 %v469, %v469
    %v478 = vpack.c.bf16 %v470, %v470
    %v479 = vpack.c.bf16 %v471, %v471
    %v480 = vpack.c.bf16 %v472, %v472
    %v481 = vpack.c.bf16 %v473, %v473
    %v482 = vpack.c.bf16 %v474, %v474
    %s483 = scalar_lea.vmem [#allocation2], 128
    %v484 = vld [vmem:[%s483] sm:$0xf]
    %v485 = vld [vmem:[%s483 + $0x4] sm:$0xf]
    %v486 = vld [vmem:[%s483 + $0x8] sm:$0xf]
    %v487 = vld [vmem:[%s483 + $0xc] sm:$0xf]
    %v488 = vld [vmem:[%s483 + $0x10] sm:$0xf]
    %v489 = vld [vmem:[%s483 + $0x14] sm:$0xf]
    %v490 = vld [vmem:[%s483 + $0x18] sm:$0xf]
    %v491 = vld [vmem:[%s483 + $0x1c] sm:$0xf]
    %v492 = vld [vmem:[%s483 + $0x20] sm:$0xf]
    %v493 = vld [vmem:[%s483 + $0x24] sm:$0xf]
    %v494 = vld [vmem:[%s483 + $0x28] sm:$0xf]
    %v495 = vld [vmem:[%s483 + $0x2c] sm:$0xf]
    %v496 = vld [vmem:[%s483 + $0x30] sm:$0xf]
    %v497 = vld [vmem:[%s483 + $0x34] sm:$0xf]
    %v498 = vld [vmem:[%s483 + $0x38] sm:$0xf]
    %v499 = vld [vmem:[%s483 + $0x3c] sm:$0xf]
    %v500 = vperm.slane %v57, 3
    %v509 = vunpack.c.l.b16 %v475
    %v510 = vunpack.c.l.b16 %v476
    %v511 = vunpack.c.l.b16 %v477
    %v512 = vunpack.c.l.b16 %v478
    %v513 = vunpack.c.l.b16 %v479
    %v514 = vunpack.c.l.b16 %v480
    %v515 = vunpack.c.l.b16 %v481
    %v516 = vunpack.c.l.b16 %v482
    %vm517 = vcmask 1041409
    %v518 = vsel %vm517, %v510, %v509
    %vm519 = vcmask 1042434
    %v520 = vsel %vm519, %v511, %v518
    %vm521 = vcmask 1043459
    %v522 = vsel %vm521, %v512, %v520
    %vm523 = vcmask 1044484
    %v524 = vsel %vm523, %v513, %v522
    %vm525 = vcmask 1045509
    %v526 = vsel %vm525, %v514, %v524
    %vm527 = vcmask 1046534
    %v528 = vsel %vm527, %v515, %v526
    %vm529 = vcmask 1047559
    %v530 = vsel %vm529, %v516, %v528
    %v531 = vpack.c.b16 %v530, %v530
    %v549 = vunpack.c.l.b16 %v484
    %v550 = vunpack.c.l.b16 %v485
    %v551 = vunpack.c.l.b16 %v486
    %v552 = vunpack.c.l.b16 %v487
    %v553 = vunpack.c.l.b16 %v488
    %v554 = vunpack.c.l.b16 %v489
    %v555 = vunpack.c.l.b16 %v490
    %v556 = vunpack.c.l.b16 %v491
    %v557 = vunpack.c.l.b16 %v492
    %v558 = vunpack.c.l.b16 %v493
    %v559 = vunpack.c.l.b16 %v494
    %v560 = vunpack.c.l.b16 %v495
    %v561 = vunpack.c.l.b16 %v496
    %v562 = vunpack.c.l.b16 %v497
    %v563 = vunpack.c.l.b16 %v498
    %v564 = vunpack.c.l.b16 %v499
    %v565 = vpack.c.b16 %v550, %v549
    %v566 = vpack.c.b16 %v552, %v551
    %v567 = vpack.c.b16 %v554, %v553
    %v568 = vpack.c.b16 %v556, %v555
    %v569 = vpack.c.b16 %v558, %v557
    %v570 = vpack.c.b16 %v560, %v559
    %v571 = vpack.c.b16 %v562, %v561
    %v572 = vpack.c.b16 %v564, %v563
    %581 = vmatpush.bf16.msra.mxu0 %v572
    %582 = vmatpush.bf16.msra.mxu0 %v571
    %583 = vmatpush.bf16.msra.mxu0 %v570
    %584 = vmatpush.bf16.msra.mxu0 %v569
    %585 = vmatpush.bf16.msra.mxu0 %v568
    %586 = vmatpush.bf16.msra.mxu0 %v567
    %587 = vmatpush.bf16.msra.mxu0 %v566
    %588 = vmatpush.bf16.msra.mxu0 %v565
    %589 = vmatmul.bf16.gmra.mxu0 %v531
    %v590 = vpop.f32.mrf.mxu0
    %v591 = vadd.f32 %v500, %v590
    %v592 = vpop.f32.mrf.mxu0
    %593 = vdwg.mxu0
    %vm594 = vcmp.gt.f32.partialorder %v591, 20.0
    %v595 = vmin.f32 %v591, 20.0
    %v596 = vmul.f32 %v595, 1.442695
    %v597 = vpow.pop %v596
    %v598 = vadd.f32 %v597, 1.0
    %v599 = vlog2.pop %v598
    %v600 = vmul.f32 %v599, 0.6931472
    %v601 = vmul.f32 -0.5, %v597
    %v602 = vadd.f32 %v601, 1.0
    %v603 = vmul.f32 %v602, %v597
    %v604 = vand.u32 2147483647, %v597
    %vm605 = vcmp.lt.f32.partialorder %v604, 0.0004427343
    %v606 = vsel %vm605, %v603, %v600
    %v607 = vsel %vm594, %v591, %v606
    %v608 = vlaneseq
    %v609 = vand.u32 %v608, 127
    %vm610 = vcmp.ge.s32.totalorder %v609, 16
    %v611 = vsel %vm610, %v607, %v591
    %612 = vst [vmem:[#allocation5] sm:$0xff] %v611
    // Predicated region
    $region30: #{tpu_custom_call.1} parent=1 // pred_check
      _
    $region31: #{tpu_custom_call.1} parent=1 // pred_check_branch
      %614 = sbr.rel (0) target = $region33
    $region32: #{tpu_custom_call.1} parent=1 // pred_region
      %616 = vsyncadd [#allocation4], 0
      %s618 = sshll.u32 [#allocation5], 4
      %s619 = int_to_ptr.vmem [resolvable:$true] %s618
      %s620 = sshll.u32 %s6, 4
      %s621 = int_to_ptr.hbm [resolvable:$true] %s620
      %623 = dma.vmem_to_hbm [thread:$0]  %s619, 128, %s621, [#allocation4]
    $region33: #{tpu_custom_call.1} parent=1 // pred_fallthru
      _
    // Predicated region
    $region34: #{tpu_custom_call.1} parent=1 // pred_check
      _
    $region35: #{tpu_custom_call.1} parent=1 // pred_check_branch
      %625 = sbr.rel (0) target = $region37
    $region36: #{tpu_custom_call.1} parent=1 // pred_region
      %627 = dma.done [#allocation4], 128
    $region37: #{tpu_custom_call.1} parent=1 // pred_fallthru
      _
    %628 = vsyncpa [#allocation3], 1
    %629 = vsyncpa [#allocation4], 1

</llo_original>
